<compile_context>
chip_gen: v5e
topology: v5e:2x2
jax: 0.10.0
libtpu: 0.0.40
codegen_flags: <defaults>
</compile_context>

<pallas_src>
import functools
import math

import jax
import jax.numpy as jnp
from jax.experimental import pallas as pl
from jax.experimental.pallas import tpu as pltpu


def _round_up(n: int, m: int) -> int:
    return (n + m - 1) // m * m


def _cdiv(a: int, b: int) -> int:
    return -(-a // b)


def qnetwork_kernel(x_ref, w1_ref, b1_ref, w2_ref, b2_ref, w3_ref, b3_ref, o_ref):
    # x streamed from HBM as f32 (read once), cast to bf16 in-register for the MXU.
    x = x_ref[...].astype(jnp.bfloat16)
    # fc1: bf16 MXU matmul, f32 accumulate; bias + ReLU in f32.
    h1 = jnp.dot(x, w1_ref[...], preferred_element_type=jnp.float32)
    h1 = jnp.maximum(h1 + b1_ref[...], 0.0)
    # fc2
    h2 = jnp.dot(h1.astype(jnp.bfloat16), w2_ref[...],
                 preferred_element_type=jnp.float32)
    h2 = jnp.maximum(h2 + b2_ref[...], 0.0)
    # fc3 (no activation). Compute on the padded 128-lane weight, but store only the
    # real out_size columns -> unpadded HBM writeback (no write amplification).
    out = jnp.dot(h2.astype(jnp.bfloat16), w3_ref[...],
                  preferred_element_type=jnp.float32)
    n_out = o_ref.shape[-1]
    o_ref[...] = (out[:, :n_out] + b3_ref[...]).astype(o_ref.dtype)


def prepare_params(params):
    """One-time weight prep (hoisted out of the per-call forward): pad hidden/out
    feature dims to 128 lanes (zeros), cast matmul weights to bf16, keep biases f32.
    b3 stays unpadded so its shape carries out_size into the jitted forward."""
    w1, b1 = params["w1"], params["b1"]
    w2, b2 = params["w2"], params["b2"]
    w3, b3 = params["w3"], params["b3"]
    in_size, hidden = w1.shape
    out_size = w3.shape[1]
    hp = _round_up(hidden, 128)
    op = _round_up(out_size, 128)
    w1p = jnp.zeros((in_size, hp), jnp.bfloat16).at[:, :hidden].set(w1.astype(jnp.bfloat16))
    b1p = jnp.zeros((1, hp), jnp.float32).at[:, :hidden].set(b1.astype(jnp.float32))
    w2p = jnp.zeros((hp, hp), jnp.bfloat16).at[:hidden, :hidden].set(w2.astype(jnp.bfloat16))
    b2p = jnp.zeros((1, hp), jnp.float32).at[:, :hidden].set(b2.astype(jnp.float32))
    w3p = jnp.zeros((hp, op), jnp.bfloat16).at[:hidden, :out_size].set(w3.astype(jnp.bfloat16))
    b3u = b3.astype(jnp.float32).reshape(1, out_size)
    return {"w1p": w1p, "b1p": b1p, "w2p": w2p, "b2p": b2p, "w3p": w3p, "b3": b3u}


@functools.partial(jax.jit, static_argnames=("block_batch",))
def qnetwork_forward(x, prepared, *, block_batch=4096):
    """x: (batch, input_size) f32. prepared: output of prepare_params."""
    w1p, b1p = prepared["w1p"], prepared["b1p"]
    w2p, b2p = prepared["w2p"], prepared["b2p"]
    w3p, b3 = prepared["w3p"], prepared["b3"]

    batch, in_size = x.shape
    hp = w1p.shape[1]
    op = w3p.shape[1]
    out_size = b3.shape[1]

    # --- batch tiling: minimal padding; >=2 grid steps when batch allows so the
    #     "parallel" axis actually shards across both v7x TensorCores. ---
    n_steps = _cdiv(batch, block_batch)
    if n_steps < 2 and batch >= 16:
        n_steps = 2
    tb = _round_up(_cdiv(batch, n_steps), 8)
    bp = n_steps * tb
    xp = x if bp == batch else jnp.pad(x, ((0, bp - batch), (0, 0)))
    grid = (n_steps,)

    # --- scheduling hints ---
    w_bytes = (w1p.size + w2p.size + w3p.size) * 2 + (b1p.size + b2p.size + b3.size) * 4
    flops = 2 * bp * (in_size * hp + hp * hp + hp * op)
    bytes_accessed = bp * in_size * 4 + w_bytes + bp * out_size * 4
    cost = pl.CostEstimate(flops=flops, transcendentals=0, bytes_accessed=bytes_accessed)

    # VMEM budget: double-buffered x/out blocks, resident weights/biases, and the
    # in-kernel intermediates (bf16 x copy, h1/h2 f32 + bf16 copies, padded fc3 result).
    vmem_bytes = (
        2 * (tb * in_size * 4)          # x blocks (f32), double-buffered
        + 2 * (tb * out_size * 4)       # out blocks (f32), double-buffered
        + 2 * w_bytes                   # resident weights/biases (buffer margin)
        + tb * in_size * 2              # bf16 copy of x
        + 2 * (tb * hp * 4)             # h1, h2 (f32)
        + 2 * (tb * hp * 2)             # bf16 copies of h1, h2
        + tb * op * 4                   # fc3 f32 result before column slice
    )
    try:
        cap = int(0.75 * pltpu.get_tpu_info().vmem_capacity_bytes)
    except Exception:
        cap = 48 << 20                  # safe under v7x's 64 MiB per-TC VMEM
    vmem_limit = max(min(int(vmem_bytes * 1.5) + (1 << 20), cap), 4 << 20)

    # NOTE: if profiling ever shows exposed writeback DMA, add
    # pipeline_mode=pl.Buffered(3) on the x in_spec and out_spec.
    const2 = lambda i: (0, 0)
    out = pl.pallas_call(
        qnetwork_kernel,
        out_shape=jax.ShapeDtypeStruct((bp, out_size), jnp.float32),
        grid=grid,
        in_specs=[
            pl.BlockSpec((tb, in_size), lambda i: (i, 0)),   # x: streamed per block (f32)
            pl.BlockSpec((in_size, hp), const2),             # weights/biases: VMEM-resident
            pl.BlockSpec((1, hp), const2),
            pl.BlockSpec((hp, hp), const2),
            pl.BlockSpec((1, hp), const2),
            pl.BlockSpec((hp, op), const2),
            pl.BlockSpec((1, out_size), const2),
        ],
        out_specs=pl.BlockSpec((tb, out_size), lambda i: (i, 0)),
        compiler_params=pltpu.CompilerParams(
            dimension_semantics=("parallel",),
            vmem_limit_bytes=vmem_limit,
        ),
        cost_estimate=cost,
    )(xp, w1p, b1p, w2p, b2p, w3p, b3)

    return out if bp == batch else out[:batch]


def init_params(key, input_size, output_size, hidden=64):
    """PyTorch nn.Linear default init (uniform +-1/sqrt(fan_in)); weights stored (in, out)."""
    def linear(k, fan_in, fan_out):
        kw, kb = jax.random.split(k)
        bound = 1.0 / math.sqrt(fan_in)
        w = jax.random.uniform(kw, (fan_in, fan_out), jnp.float32, -bound, bound)
        b = jax.random.uniform(kb, (1, fan_out), jnp.float32, -bound, bound)
        return w, b

    k1, k2, k3 = jax.random.split(key, 3)
    w1, b1 = linear(k1, input_size, hidden)
    w2, b2 = linear(k2, hidden, hidden)
    w3, b3 = linear(k3, hidden, output_size)
    return {"w1": w1, "b1": b1, "w2": w2, "b2": b2, "w3": w3, "b3": b3}


def reference_forward(x, params, *, matmul_dtype=jnp.float32):
    """Pure-JAX reference with the same precision policy as the kernel when
    matmul_dtype=bf16 (bf16 matmul inputs, f32 accumulation / bias / ReLU)."""
    w1 = params["w1"].astype(matmul_dtype)
    w2 = params["w2"].astype(matmul_dtype)
    w3 = params["w3"].astype(matmul_dtype)
    h1 = jnp.maximum(
        jnp.dot(x.astype(matmul_dtype), w1, preferred_element_type=jnp.float32)
        + params["b1"], 0.0)
    h2 = jnp.maximum(
        jnp.dot(h1.astype(matmul_dtype), w2, preferred_element_type=jnp.float32)
        + params["b2"], 0.0)
    return (jnp.dot(h2.astype(matmul_dtype), w3, preferred_element_type=jnp.float32)
            + params["b3"])


if __name__ == "__main__":
    key = jax.random.PRNGKey(0)
    k_params, k_x = jax.random.split(key)

    batch, input_size, output_size = 8, 16, 4
    params = init_params(k_params, input_size, output_size)
    prepared = prepare_params(params)           # one-time weight prep (pad + bf16 cast)
    x = jax.random.normal(k_x, (batch, input_size), jnp.float32)

    out = qnetwork_forward(x, prepared)
    out = jax.block_until_ready(out)
    assert out.shape == (batch, output_size)

    # Tight check vs a reference with the same bf16-matmul / f32-accumulate policy.
    ref_bf16 = reference_forward(x, params, matmul_dtype=jnp.bfloat16)
    assert jnp.allclose(out, ref_bf16, atol=1e-3, rtol=1e-3), "mismatch vs bf16-policy reference"

    # Loose sanity check vs the full-f32 reference (bf16 rounding is the only delta).
    ref_f32 = reference_forward(x, params, matmul_dtype=jnp.float32)
    assert jnp.allclose(out, ref_f32, atol=5e-2, rtol=5e-2), "mismatch vs f32 reference"

    print("KERNEL_OK")
</pallas_src>

<mosaic_0001>
module attributes {stable_mosaic.version = 11 : i64} {
  func.func @qnetwork_kernel(%arg0: i32, %arg1: memref<8x16xf32, #tpu.memory_space<vmem>>, %arg2: memref<16x128xbf16, #tpu.memory_space<vmem>>, %arg3: memref<1x128xf32, #tpu.memory_space<vmem>>, %arg4: memref<128x128xbf16, #tpu.memory_space<vmem>>, %arg5: memref<1x128xf32, #tpu.memory_space<vmem>>, %arg6: memref<128x128xbf16, #tpu.memory_space<vmem>>, %arg7: memref<1x4xf32, #tpu.memory_space<vmem>>, %arg8: memref<8x4xf32, #tpu.memory_space<vmem>>) attributes {dimension_semantics = [#tpu.dimension_semantics<parallel>], iteration_bounds = array<i64: 1>, scalar_prefetch = 0 : i64, scratch_operands = 0 : i64, tpu.core_type = #tpu.core_type<tc>, window_params = [{transform_indices = @transform_0, window_bounds = array<i64: 8, 16>}, {pipeline_mode = #tpu.pipeline_mode<synchronous>, transform_indices = @transform_1, window_bounds = array<i64: 16, 128>}, {pipeline_mode = #tpu.pipeline_mode<synchronous>, transform_indices = @transform_2, window_bounds = array<i64: 1, 128>}, {pipeline_mode = #tpu.pipeline_mode<synchronous>, transform_indices = @transform_3, window_bounds = array<i64: 128, 128>}, {pipeline_mode = #tpu.pipeline_mode<synchronous>, transform_indices = @transform_4, window_bounds = array<i64: 1, 128>}, {pipeline_mode = #tpu.pipeline_mode<synchronous>, transform_indices = @transform_5, window_bounds = array<i64: 128, 128>}, {pipeline_mode = #tpu.pipeline_mode<synchronous>, transform_indices = @transform_6, window_bounds = array<i64: 1, 4>}, {transform_indices = @transform_7, window_bounds = array<i64: 8, 4>}]} {
    %c0 = arith.constant 0 : index
    %c0_0 = arith.constant 0 : index
    %0 = vector.load %arg1[%c0, %c0_0] : memref<8x16xf32, #tpu.memory_space<vmem>>, vector<8x16xf32>
    %1 = arith.truncf %0 : vector<8x16xf32> to vector<8x16xbf16>
    %c0_1 = arith.constant 0 : index
    %c0_2 = arith.constant 0 : index
    %2 = vector.load %arg2[%c0_1, %c0_2] : memref<16x128xbf16, #tpu.memory_space<vmem>>, vector<16x128xbf16>
    %cst = arith.constant dense<0.000000e+00> : vector<8x128xf32>
    %3 = tpu.matmul %1, %2, %cst {dimension_numbers = #tpu.dot_dimension_numbers<[1], [0], [0], [1], [0, 0, 1, 1], [], []>} : vector<8x16xbf16>, vector<16x128xbf16>, vector<8x128xf32> -> vector<8x128xf32>
    %c0_3 = arith.constant 0 : index
    %c0_4 = arith.constant 0 : index
    %4 = vector.load %arg3[%c0_3, %c0_4] : memref<1x128xf32, #tpu.memory_space<vmem>>, vector<1x128xf32>
    %5 = vector.broadcast %4 : vector<1x128xf32> to vector<8x128xf32>
    %6 = arith.addf %3, %5 : vector<8x128xf32>
    %cst_5 = arith.constant 0.000000e+00 : f32
    %7 = vector.broadcast %cst_5 : f32 to vector<8x128xf32>
    %8 = arith.maximumf %6, %7 : vector<8x128xf32>
    %9 = arith.truncf %8 : vector<8x128xf32> to vector<8x128xbf16>
    %c0_6 = arith.constant 0 : index
    %c0_7 = arith.constant 0 : index
    %10 = vector.load %arg4[%c0_6, %c0_7] : memref<128x128xbf16, #tpu.memory_space<vmem>>, vector<128x128xbf16>
    %cst_8 = arith.constant dense<0.000000e+00> : vector<8x128xf32>
    %11 = tpu.matmul %9, %10, %cst_8 {dimension_numbers = #tpu.dot_dimension_numbers<[1], [0], [0], [1], [0, 0, 1, 1], [], []>} : vector<8x128xbf16>, vector<128x128xbf16>, vector<8x128xf32> -> vector<8x128xf32>
    %c0_9 = arith.constant 0 : index
    %c0_10 = arith.constant 0 : index
    %12 = vector.load %arg5[%c0_9, %c0_10] : memref<1x128xf32, #tpu.memory_space<vmem>>, vector<1x128xf32>
    %13 = vector.broadcast %12 : vector<1x128xf32> to vector<8x128xf32>
    %14 = arith.addf %11, %13 : vector<8x128xf32>
    %cst_11 = arith.constant 0.000000e+00 : f32
    %15 = vector.broadcast %cst_11 : f32 to vector<8x128xf32>
    %16 = arith.maximumf %14, %15 : vector<8x128xf32>
    %17 = arith.truncf %16 : vector<8x128xf32> to vector<8x128xbf16>
    %c0_12 = arith.constant 0 : index
    %c0_13 = arith.constant 0 : index
    %18 = vector.load %arg6[%c0_12, %c0_13] : memref<128x128xbf16, #tpu.memory_space<vmem>>, vector<128x128xbf16>
    %cst_14 = arith.constant dense<0.000000e+00> : vector<8x128xf32>
    %19 = tpu.matmul %17, %18, %cst_14 {dimension_numbers = #tpu.dot_dimension_numbers<[1], [0], [0], [1], [0, 0, 1, 1], [], []>} : vector<8x128xbf16>, vector<128x128xbf16>, vector<8x128xf32> -> vector<8x128xf32>
    %20 = vector.extract_strided_slice %19 {offsets = [0, 0], sizes = [8, 4], strides = [1, 1]} : vector<8x128xf32> to vector<8x4xf32>
    %c0_15 = arith.constant 0 : index
    %c0_16 = arith.constant 0 : index
    %21 = vector.load %arg7[%c0_15, %c0_16] : memref<1x4xf32, #tpu.memory_space<vmem>>, vector<1x4xf32>
    %22 = vector.broadcast %21 : vector<1x4xf32> to vector<8x4xf32>
    %23 = arith.addf %20, %22 : vector<8x4xf32>
    %c0_17 = arith.constant 0 : index
    %c0_18 = arith.constant 0 : index
    %24 = vector.load %arg8[%c0_17, %c0_18] : memref<8x4xf32, #tpu.memory_space<vmem>>, vector<8x4xf32>
    tpu.vector_store %arg8[%c0_17, %c0_18], %23 {strides = array<i32>} : memref<8x4xf32, #tpu.memory_space<vmem>>, vector<8x4xf32>,
    return
  }
  func.func @transform_0(%arg0: i32) -> (i32, i32) {
    %c0_i32 = arith.constant 0 : i32
    %c0_i32_0 = arith.constant 0 : i32
    return %arg0, %c0_i32 : i32, i32
  }
  func.func @transform_1(%arg0: i32) -> (i32, i32) {
    %c0_i32 = arith.constant 0 : i32
    %c0_i32_0 = arith.constant 0 : i32
    %c0_i32_1 = arith.constant 0 : i32
    return %c0_i32, %c0_i32_0 : i32, i32
  }
  func.func @transform_2(%arg0: i32) -> (i32, i32) {
    %c0_i32 = arith.constant 0 : i32
    %c0_i32_0 = arith.constant 0 : i32
    %c0_i32_1 = arith.constant 0 : i32
    return %c0_i32, %c0_i32_0 : i32, i32
  }
  func.func @transform_3(%arg0: i32) -> (i32, i32) {
    %c0_i32 = arith.constant 0 : i32
    %c0_i32_0 = arith.constant 0 : i32
    %c0_i32_1 = arith.constant 0 : i32
    return %c0_i32, %c0_i32_0 : i32, i32
  }
  func.func @transform_4(%arg0: i32) -> (i32, i32) {
    %c0_i32 = arith.constant 0 : i32
    %c0_i32_0 = arith.constant 0 : i32
    %c0_i32_1 = arith.constant 0 : i32
    return %c0_i32, %c0_i32_0 : i32, i32
  }
  func.func @transform_5(%arg0: i32) -> (i32, i32) {
    %c0_i32 = arith.constant 0 : i32
    %c0_i32_0 = arith.constant 0 : i32
    %c0_i32_1 = arith.constant 0 : i32
    return %c0_i32, %c0_i32_0 : i32, i32
  }
  func.func @transform_6(%arg0: i32) -> (i32, i32) {
    %c0_i32 = arith.constant 0 : i32
    %c0_i32_0 = arith.constant 0 : i32
    %c0_i32_1 = arith.constant 0 : i32
    return %c0_i32, %c0_i32_0 : i32, i32
  }
  func.func @transform_7(%arg0: i32) -> (i32, i32) {
    %c0_i32 = arith.constant 0 : i32
    %c0_i32_0 = arith.constant 0 : i32
    return %arg0, %c0_i32 : i32, i32
  }
}

</mosaic_0001>

<llo_original>
// kernel: qnetwork_forward.1
$region0: #{qnetwork_forward.1}
  #allocation0 [shape = 'u32[]', space=smem, size = 0x4, offset = 0x4, fixed_abs, tag = 'smem constant byte address 0x4 - core index']
  #allocation1 [shape = 'u32[72,128]{1,0:T(1,128)}', space=vmem, size = 0x9000, scoped, tag = 'internal scratch']
  %s0 = inlined_call_operand.hbm [shape: f32[8,16], index: 0, kind: input, shape index: {}]
  %s1 = inlined_call_operand.hbm [shape: bf16[16,128], index: 1, kind: input, shape index: {}]
  %s2 = inlined_call_operand.hbm [shape: f32[1,128], index: 2, kind: input, shape index: {}]
  %s3 = inlined_call_operand.hbm [shape: bf16[128,128], index: 3, kind: input, shape index: {}]
  %s4 = inlined_call_operand.vmem [shape: f32[1,128], index: 4, kind: input, shape index: {}]
  %s5 = inlined_call_operand.hbm [shape: bf16[128,128], index: 5, kind: input, shape index: {}]
  %s6 = inlined_call_operand.vmem [shape: f32[1,4], index: 6, kind: input, shape index: {}]
  %s7 = inlined_call_operand.vmem [shape: f32[8,4], index: 7, kind: output, shape index: {}]
  %s8 = sld [smem:[#allocation0]]
  $region58: #{qnetwork_forward.1} parent=0
    _
  %s10 = ssub.s32 1, %s8
  %s11 = scalar_select 0, %s10, %s8
  $region1: #{qnetwork_forward.1} parent=0
    #allocation2 [shape = 'u8[4096]{0}', space=vmem, size = 0x1000, scoped, tag = 'input window, operand 0, single buffered']
    #allocation3 [shape = 's32[1]{0}', space=sflag, size = 0x4, scoped, tag = 'scoped memory for qnetwork_forward.1']
    #allocation4 [shape = 'u8[4096]{0}', space=vmem, size = 0x1000, scoped, tag = 'input window, operand 1, single buffered']
    #allocation5 [shape = 's32[1]{0}', space=sflag, size = 0x4, scoped, tag = 'scoped memory for qnetwork_forward.1']
    #allocation6 [shape = 'u8[512]{0}', space=vmem, size = 0x400, scoped, tag = 'input window, operand 2, single buffered']
    #allocation7 [shape = 'u8[32768]{0}', space=vmem, size = 0x8000, scoped, tag = 'input window, operand 3, single buffered']
    #allocation8 [shape = 's32[1]{0}', space=sflag, size = 0x4, scoped, tag = 'scoped memory for qnetwork_forward.1']
    #allocation9 [shape = 'u8[32768]{0}', space=vmem, size = 0x8000, scoped, tag = 'input window, operand 5, single buffered']
    %12 = vsyncpa [#allocation3], 0
    %13 = vsyncpa [#allocation5], 0
    %14 = vsyncpa [#allocation8], 0
    // Predicated region
    $region2: #{qnetwork_forward.1} parent=1 // pred_check
      _
    $region3: #{qnetwork_forward.1} parent=1 // pred_check_branch
      %16 = sbr.rel (0) target = $region5
    $region4: #{qnetwork_forward.1} parent=1 // pred_region
      %18 = vsyncadd [#allocation3], 0
      %s20 = sshll.u32 %s0, 4
      %s21 = int_to_ptr.hbm [resolvable:$true] %s20
      %s22 = sshll.u32 [#allocation2], 4
      %s23 = int_to_ptr.vmem [resolvable:$true] %s22
      %25 = dma.hbm_to_vmem [thread:$0]  %s21, 128, %s23, [#allocation3]
    $region5: #{qnetwork_forward.1} parent=1 // pred_fallthru
      _
    // Predicated region
    $region6: #{qnetwork_forward.1} parent=1 // pred_check
      _
    $region7: #{qnetwork_forward.1} parent=1 // pred_check_branch
      %27 = sbr.rel (0) target = $region9
    $region8: #{qnetwork_forward.1} parent=1 // pred_region
      %29 = vsyncadd [#allocation5], 0
      %s30 = sshll.u32 %s1, 4
      %s31 = int_to_ptr.hbm [resolvable:$true] %s30
      %s32 = sshll.u32 [#allocation4], 4
      %s33 = int_to_ptr.vmem [resolvable:$true] %s32
      %38 = dma.hbm_to_vmem [thread:$0]  %s31, 128, %s33, [#allocation5], 64, 64, 4
    $region9: #{qnetwork_forward.1} parent=1 // pred_fallthru
      _
    // Predicated region
    $region10: #{qnetwork_forward.1} parent=1 // pred_check
      _
    $region11: #{qnetwork_forward.1} parent=1 // pred_check_branch
      %40 = sbr.rel (0) target = $region13
    $region12: #{qnetwork_forward.1} parent=1 // pred_region
      %42 = vsyncadd [#allocation5], 0
      %s44 = sshll.u32 %s2, 4
      %s45 = int_to_ptr.hbm [resolvable:$true] %s44
      %s46 = sshll.u32 [#allocation6], 4
      %s47 = int_to_ptr.vmem [resolvable:$true] %s46
      %49 = dma.hbm_to_vmem [thread:$0]  %s45, 16, %s47, [#allocation5]
    $region13: #{qnetwork_forward.1} parent=1 // pred_fallthru
      _
    // Predicated region
    $region14: #{qnetwork_forward.1} parent=1 // pred_check
      _
    $region15: #{qnetwork_forward.1} parent=1 // pred_check_branch
      %51 = sbr.rel (0) target = $region17
    $region16: #{qnetwork_forward.1} parent=1 // pred_region
      %53 = vsyncadd [#allocation8], 0
      %s54 = sshll.u32 %s3, 4
      %s55 = int_to_ptr.hbm [resolvable:$true] %s54
      %s56 = sshll.u32 [#allocation7], 4
      %s57 = int_to_ptr.vmem [resolvable:$true] %s56
      %62 = dma.hbm_to_vmem [thread:$0]  %s55, 1024, %s57, [#allocation8], 64, 64, 4
    $region17: #{qnetwork_forward.1} parent=1 // pred_fallthru
      _
    // Predicated region
    $region18: #{qnetwork_forward.1} parent=1 // pred_check
      _
    $region19: #{qnetwork_forward.1} parent=1 // pred_check_branch
      %64 = sbr.rel (0) target = $region21
    $region20: #{qnetwork_forward.1} parent=1 // pred_region
      _
    $region21: #{qnetwork_forward.1} parent=1 // pred_fallthru
      _
    // Predicated region
    $region22: #{qnetwork_forward.1} parent=1 // pred_check
      _
    $region23: #{qnetwork_forward.1} parent=1 // pred_check_branch
      %66 = sbr.rel (0) target = $region25
    $region24: #{qnetwork_forward.1} parent=1 // pred_region
      %68 = vsyncadd [#allocation8], 0
      %s69 = sshll.u32 %s5, 4
      %s70 = int_to_ptr.hbm [resolvable:$true] %s69
      %s71 = sshll.u32 [#allocation9], 4
      %s72 = int_to_ptr.vmem [resolvable:$true] %s71
      %77 = dma.hbm_to_vmem [thread:$0]  %s70, 1024, %s72, [#allocation8], 64, 64, 4
    $region25: #{qnetwork_forward.1} parent=1 // pred_fallthru
      _
    // Predicated region
    $region26: #{qnetwork_forward.1} parent=1 // pred_check
      _
    $region27: #{qnetwork_forward.1} parent=1 // pred_check_branch
      %79 = sbr.rel (0) target = $region29
    $region28: #{qnetwork_forward.1} parent=1 // pred_region
      _
    $region29: #{qnetwork_forward.1} parent=1 // pred_fallthru
      _
    // Predicated region
    $region30: #{qnetwork_forward.1} parent=1 // pred_check
      _
    $region31: #{qnetwork_forward.1} parent=1 // pred_check_branch
      %81 = sbr.rel (0) target = $region33
    $region32: #{qnetwork_forward.1} parent=1 // pred_region
      %83 = dma.done [#allocation3], 128
    $region33: #{qnetwork_forward.1} parent=1 // pred_fallthru
      _
    // Predicated region
    $region34: #{qnetwork_forward.1} parent=1 // pred_check
      _
    $region35: #{qnetwork_forward.1} parent=1 // pred_check_branch
      %85 = sbr.rel (0) target = $region37
    $region36: #{qnetwork_forward.1} parent=1 // pred_region
      %87 = dma.done [#allocation5], 128
    $region37: #{qnetwork_forward.1} parent=1 // pred_fallthru
      _
    // Predicated region
    $region38: #{qnetwork_forward.1} parent=1 // pred_check
      _
    $region39: #{qnetwork_forward.1} parent=1 // pred_check_branch
      %89 = sbr.rel (0) target = $region41
    $region40: #{qnetwork_forward.1} parent=1 // pred_region
      %91 = dma.done [#allocation5], 16
    $region41: #{qnetwork_forward.1} parent=1 // pred_fallthru
      _
    // Predicated region
    $region42: #{qnetwork_forward.1} parent=1 // pred_check
      _
    $region43: #{qnetwork_forward.1} parent=1 // pred_check_branch
      %93 = sbr.rel (0) target = $region45
    $region44: #{qnetwork_forward.1} parent=1 // pred_region
      %95 = dma.done [#allocation8], 1024
    $region45: #{qnetwork_forward.1} parent=1 // pred_fallthru
      _
    // Predicated region
    $region46: #{qnetwork_forward.1} parent=1 // pred_check
      _
    $region47: #{qnetwork_forward.1} parent=1 // pred_check_branch
      %97 = sbr.rel (0) target = $region49
    $region48: #{qnetwork_forward.1} parent=1 // pred_region
      %99 = dma.done [#allocation8], 1024
    $region49: #{qnetwork_forward.1} parent=1 // pred_fallthru
      _
    %v101 = vld [vmem:[#allocation2] sm:$0xff]
    %v102 = vpack.c.bf16 %v101, %v101
    %v103 = vld [vmem:[#allocation4] sm:$0xf]
    %v104 = vld [vmem:[#allocation4 + $0x4] sm:$0xf]
    %v105 = vld [vmem:[#allocation6] sm:$0x1]
    %v107 = vperm.slane %v105, 0
    %v111 = vunpack.c.l.b16 %v103
    %v112 = vunpack.c.l.b16 %v104
    %v113 = vpack.c.b16 %v112, %v111
    %vm115 = vcmask 130048
    %v117 = vsel %vm115, %v102, 0
    %119 = vmatpush.bf16.msra.mxu0 0
    %120 = vmatpush.bf16.msra.mxu0 0
    %121 = vmatpush.bf16.msra.mxu0 0
    %122 = vmatpush.bf16.msra.mxu0 0
    %123 = vmatpush.bf16.msra.mxu0 0
    %124 = vmatpush.bf16.msra.mxu0 0
    %125 = vmatpush.bf16.msra.mxu0 0
    %126 = vmatpush.bf16.msra.mxu0 %v113
    %127 = vmatmul.bf16.gmra.mxu0 %v117
    %v128 = vpop.f32.mrf.mxu0
    %v129 = vadd.f32 %v107, %v128
    %v130 = vpop.f32.mrf.mxu0
    %131 = vdwg.mxu0
    %v132 = vmax.f32 %v129, 0.0
    %v133 = vpack.c.bf16 %v132, %v132
    %v134 = vld [vmem:[#allocation7] sm:$0xf]
    %v135 = vld [vmem:[#allocation7 + $0x4] sm:$0xf]
    %v136 = vld [vmem:[#allocation7 + $0x8] sm:$0xf]
    %v137 = vld [vmem:[#allocation7 + $0xc] sm:$0xf]
    %v138 = vld [vmem:[#allocation7 + $0x10] sm:$0xf]
    %v139 = vld [vmem:[#allocation7 + $0x14] sm:$0xf]
    %v140 = vld [vmem:[#allocation7 + $0x18] sm:$0xf]
    %v141 = vld [vmem:[#allocation7 + $0x1c] sm:$0xf]
    %v142 = vld [vmem:[#allocation7 + $0x20] sm:$0xf]
    %v143 = vld [vmem:[#allocation7 + $0x24] sm:$0xf]
    %v144 = vld [vmem:[#allocation7 + $0x28] sm:$0xf]
    %v145 = vld [vmem:[#allocation7 + $0x2c] sm:$0xf]
    %v146 = vld [vmem:[#allocation7 + $0x30] sm:$0xf]
    %v147 = vld [vmem:[#allocation7 + $0x34] sm:$0xf]
    %v148 = vld [vmem:[#allocation7 + $0x38] sm:$0xf]
    %v149 = vld [vmem:[#allocation7 + $0x3c] sm:$0xf]
    %v150 = vld [vmem:[%s4] sm:$0x1]
    %v152 = vperm.slane %v150, 0
    %v170 = vunpack.c.l.b16 %v134
    %v171 = vunpack.c.l.b16 %v135
    %v172 = vunpack.c.l.b16 %v136
    %v173 = vunpack.c.l.b16 %v137
    %v174 = vunpack.c.l.b16 %v138
    %v175 = vunpack.c.l.b16 %v139
    %v176 = vunpack.c.l.b16 %v140
    %v177 = vunpack.c.l.b16 %v141
    %v178 = vunpack.c.l.b16 %v142
    %v179 = vunpack.c.l.b16 %v143
    %v180 = vunpack.c.l.b16 %v144
    %v181 = vunpack.c.l.b16 %v145
    %v182 = vunpack.c.l.b16 %v146
    %v183 = vunpack.c.l.b16 %v147
    %v184 = vunpack.c.l.b16 %v148
    %v185 = vunpack.c.l.b16 %v149
    %v186 = vpack.c.b16 %v171, %v170
    %v187 = vpack.c.b16 %v173, %v172
    %v188 = vpack.c.b16 %v175, %v174
    %v189 = vpack.c.b16 %v177, %v176
    %v190 = vpack.c.b16 %v179, %v178
    %v191 = vpack.c.b16 %v181, %v180
    %v192 = vpack.c.b16 %v183, %v182
    %v193 = vpack.c.b16 %v185, %v184
    %202 = vmatpush.bf16.msra.mxu0 %v193
    %203 = vmatpush.bf16.msra.mxu0 %v192
    %204 = vmatpush.bf16.msra.mxu0 %v191
    %205 = vmatpush.bf16.msra.mxu0 %v190
    %206 = vmatpush.bf16.msra.mxu0 %v189
    %207 = vmatpush.bf16.msra.mxu0 %v188
    %208 = vmatpush.bf16.msra.mxu0 %v187
    %209 = vmatpush.bf16.msra.mxu0 %v186
    %210 = vmatmul.bf16.gmra.mxu0 %v133
    %v211 = vpop.f32.mrf.mxu0
    %v212 = vadd.f32 %v152, %v211
    %v213 = vpop.f32.mrf.mxu0
    %214 = vdwg.mxu0
    %v215 = vmax.f32 %v212, 0.0
    %v216 = vpack.c.bf16 %v215, %v215
    %v217 = vld [vmem:[#allocation9] sm:$0xf]
    %v218 = vld [vmem:[#allocation9 + $0x4] sm:$0xf]
    %v219 = vld [vmem:[#allocation9 + $0x8] sm:$0xf]
    %v220 = vld [vmem:[#allocation9 + $0xc] sm:$0xf]
    %v221 = vld [vmem:[#allocation9 + $0x10] sm:$0xf]
    %v222 = vld [vmem:[#allocation9 + $0x14] sm:$0xf]
    %v223 = vld [vmem:[#allocation9 + $0x18] sm:$0xf]
    %v224 = vld [vmem:[#allocation9 + $0x1c] sm:$0xf]
    %v225 = vld [vmem:[#allocation9 + $0x20] sm:$0xf]
    %v226 = vld [vmem:[#allocation9 + $0x24] sm:$0xf]
    %v227 = vld [vmem:[#allocation9 + $0x28] sm:$0xf]
    %v228 = vld [vmem:[#allocation9 + $0x2c] sm:$0xf]
    %v229 = vld [vmem:[#allocation9 + $0x30] sm:$0xf]
    %v230 = vld [vmem:[#allocation9 + $0x34] sm:$0xf]
    %v231 = vld [vmem:[#allocation9 + $0x38] sm:$0xf]
    %v232 = vld [vmem:[#allocation9 + $0x3c] sm:$0xf]
    %v249 = vunpack.c.l.b16 %v217
    %v250 = vunpack.c.l.b16 %v218
    %v251 = vunpack.c.l.b16 %v219
    %v252 = vunpack.c.l.b16 %v220
    %v253 = vunpack.c.l.b16 %v221
    %v254 = vunpack.c.l.b16 %v222
    %v255 = vunpack.c.l.b16 %v223
    %v256 = vunpack.c.l.b16 %v224
    %v257 = vunpack.c.l.b16 %v225
    %v258 = vunpack.c.l.b16 %v226
    %v259 = vunpack.c.l.b16 %v227
    %v260 = vunpack.c.l.b16 %v228
    %v261 = vunpack.c.l.b16 %v229
    %v262 = vunpack.c.l.b16 %v230
    %v263 = vunpack.c.l.b16 %v231
    %v264 = vunpack.c.l.b16 %v232
    %v265 = vpack.c.b16 %v250, %v249
    %v266 = vpack.c.b16 %v252, %v251
    %v267 = vpack.c.b16 %v254, %v253
    %v268 = vpack.c.b16 %v256, %v255
    %v269 = vpack.c.b16 %v258, %v257
    %v270 = vpack.c.b16 %v260, %v259
    %v271 = vpack.c.b16 %v262, %v261
    %v272 = vpack.c.b16 %v264, %v263
    %281 = vmatpush.bf16.msra.mxu0 %v272
    %282 = vmatpush.bf16.msra.mxu0 %v271
    %283 = vmatpush.bf16.msra.mxu0 %v270
    %284 = vmatpush.bf16.msra.mxu0 %v269
    %285 = vmatpush.bf16.msra.mxu0 %v268
    %286 = vmatpush.bf16.msra.mxu0 %v267
    %287 = vmatpush.bf16.msra.mxu0 %v266
    %288 = vmatpush.bf16.msra.mxu0 %v265
    %289 = vmatmul.bf16.gmra.mxu0 %v216
    %v290 = vpop.f32.mrf.mxu0
    %v291 = vadd.f32 0.0, %v290
    %v292 = vpop.f32.mrf.mxu0
    %293 = vdwg.mxu0
    %v294 = vld [vmem:[%s6] sm:$0x1]
    %v296 = vperm.slane %v294, 0
    %v298 = vadd.f32 %v291, %v296
    %vm299 = vcmask 31744
    %300 = vst.msk [vmem:[%s7] sm:$0xff] %vm299, %v298
    // Predicated region
    $region50: #{qnetwork_forward.1} parent=1 // pred_check
      _
    $region51: #{qnetwork_forward.1} parent=1 // pred_check_branch
      %302 = sbr.rel (0) target = $region53
    $region52: #{qnetwork_forward.1} parent=1 // pred_region
      _
    $region53: #{qnetwork_forward.1} parent=1 // pred_fallthru
      _
    // Predicated region
    $region54: #{qnetwork_forward.1} parent=1 // pred_check
      _
    $region55: #{qnetwork_forward.1} parent=1 // pred_check_branch
      %304 = sbr.rel (0) target = $region57
    $region56: #{qnetwork_forward.1} parent=1 // pred_region
      _
    $region57: #{qnetwork_forward.1} parent=1 // pred_fallthru
      _
    %305 = vsyncpa [#allocation3], 1
    %306 = vsyncpa [#allocation5], 1
    %307 = vsyncpa [#allocation8], 1

</llo_original>
